<compile_context>
chip_gen: v5e
topology: v5e:2x2
jax: 0.10.0
libtpu: 0.0.40
codegen_flags: <defaults>
</compile_context>

<pallas_src>
import functools

import jax
import jax.numpy as jnp
from jax.experimental import pallas as pl
from jax.experimental.pallas import tpu as pltpu

LANE = 128      # lane padding for hidden features
OUT_DIM = 2     # final Linear(32, 2) output width


def mlp_kernel(x_ref,
               w1_ref, t1_ref,
               w2_ref, t2_ref,
               w3_ref, t3_ref,
               w4_ref, b4_ref,
               out_ref):
    # x arrives f32; cast to bf16 in-kernel (cheap VPU work, hidden under dot).
    x = x_ref[...].astype(jnp.bfloat16)

    # Layer 1: Linear(+folded BN scale) + shift + ReLU     (Dropout = identity)
    h = jnp.dot(x, w1_ref[...], preferred_element_type=jnp.float32)
    h = jnp.maximum(h + t1_ref[...], 0.0).astype(jnp.bfloat16)

    # Layer 2: Linear(+folded BN scale) + shift + ReLU     (Dropout = identity)
    h = jnp.dot(h, w2_ref[...], preferred_element_type=jnp.float32)
    h = jnp.maximum(h + t2_ref[...], 0.0).astype(jnp.bfloat16)

    # Layer 3: Linear(+folded BN scale) + shift + ReLU
    h = jnp.dot(h, w3_ref[...], preferred_element_type=jnp.float32)
    h = jnp.maximum(h + t3_ref[...], 0.0).astype(jnp.bfloat16)

    # Layer 4: Linear(32, 2); weights padded to 128 lanes, only 2 cols stored.
    h = jnp.dot(h, w4_ref[...], preferred_element_type=jnp.float32)
    out_ref[...] = (h[:, :OUT_DIM] + b4_ref[...]).astype(out_ref.dtype)


def fold_bn(bias, gamma, beta, running_mean, running_var, eps=1e-5):
    """Fold Linear bias + BatchNorm1d (eval mode) into per-feature scale/shift."""
    inv_std = 1.0 / jnp.sqrt(running_var + eps)
    scale = gamma * inv_std                          # multiplies (x @ W)
    shift = (bias - running_mean) * scale + beta     # added afterwards
    return scale, shift


def _round_up(n, m):
    return ((n + m - 1) // m) * m


def _pad2d(a, rows, cols):
    return jnp.pad(a, ((0, rows - a.shape[0]), (0, cols - a.shape[1])))


@functools.partial(jax.jit, static_argnames=("block_m",))
def mlp_forward(x, params, block_m=2048):
    """x: (B, input_size) float32.  Returns (B, 2) float32."""
    B, D_in = x.shape
    (w1, b1, g1, be1, rm1, rv1,
     w2, b2, g2, be2, rm2, rv2,
     w3, b3, g3, be3, rm3, rv3,
     w4, b4) = params

    # --- Fold BN scale into weight columns; keep only the shifts (f32 fold). --
    s1, t1 = fold_bn(b1, g1, be1, rm1, rv1)
    s2, t2 = fold_bn(b2, g2, be2, rm2, rv2)
    s3, t3 = fold_bn(b3, g3, be3, rm3, rv3)

    # Hidden feature dims zero-padded to 128 lanes (padded columns stay exactly
    # zero through shift(0) + ReLU, padded weight rows are zero -> unchanged).
    w1f = (w1 * s1[None, :]).astype(jnp.bfloat16)                    # (D_in,128)
    w2f = _pad2d(w2 * s2[None, :], LANE, LANE).astype(jnp.bfloat16)  # (128,128)
    w3f = _pad2d(w3 * s3[None, :], LANE, LANE).astype(jnp.bfloat16)  # (128,128)
    w4f = _pad2d(w4, LANE, LANE).astype(jnp.bfloat16)                # (128,128)

    t1p = t1[None, :]                                                # (1,128)
    t2p = jnp.pad(t2, (0, LANE - t2.shape[0]))[None, :]
    t3p = jnp.pad(t3, (0, LANE - t3.shape[0]))[None, :]
    b4p = b4[None, :]                                                # (1,2)

    # --- Batch tiling: 16-aligned tile; pad only if B is not a multiple; ------
    # prefer >= 2 grid steps so both v7x TensorCores get work on the
    # "parallel" axis (no cost on single-TC v5e/v6e).
    bm = _round_up(min(block_m, _round_up(B, 16)), 16)
    if bm >= B and B >= 32:
        bm = _round_up(pl.cdiv(B, 2), 16)
    B_pad = _round_up(B, bm)
    x_p = x if B_pad == B else jnp.pad(x, ((0, B_pad - B), (0, 0)))
    grid = (B_pad // bm,)

    def full_spec(shape):
        return pl.BlockSpec(shape, lambda i: (0, 0))

    # Right-sized VMEM limit: double-buffered x/out tiles + weights + scratch
    # headroom for the f32/bf16 intermediates (floor 16 MiB, cap 64 MiB).
    weights_b = 2 * ((D_in * LANE + 3 * LANE * LANE) * 2
                     + (3 * LANE + OUT_DIM) * 4)
    io_b = 2 * bm * D_in * 4 + 2 * bm * OUT_DIM * 4
    scratch_b = 6 * bm * LANE * 4
    vmem_limit = int(min(max(weights_b + io_b + scratch_b + (4 << 20),
                             16 << 20), 64 << 20))

    out = pl.pallas_call(
        mlp_kernel,
        out_shape=jax.ShapeDtypeStruct((B_pad, OUT_DIM), jnp.float32),
        grid_spec=pltpu.PrefetchScalarGridSpec(
            num_scalar_prefetch=0,
            grid=grid,
            in_specs=[
                pl.BlockSpec((bm, D_in), lambda i: (i, 0)),   # x tile (f32)
                full_spec(w1f.shape), full_spec(t1p.shape),
                full_spec(w2f.shape), full_spec(t2p.shape),
                full_spec(w3f.shape), full_spec(t3p.shape),
                full_spec(w4f.shape), full_spec(b4p.shape),
            ],
            out_specs=pl.BlockSpec((bm, OUT_DIM), lambda i: (i, 0)),
        ),
        compiler_params=pltpu.CompilerParams(
            dimension_semantics=("parallel",),
            vmem_limit_bytes=vmem_limit),
    )(x_p, w1f, t1p, w2f, t2p, w3f, t3p, w4f, b4p)

    return out[:B]


def init_params(key, input_size):
    """Deterministic parameter init mirroring the PyTorch module's shapes.

    Linear weights stored as (in, out) == W.T of PyTorch's (out, in).
    BatchNorm1d: gamma=1, beta=0, running_mean=0, running_var=1 (as at init).
    """
    dims = [(input_size, 128), (128, 64), (64, 32), (32, 2)]
    keys = jax.random.split(key, 2 * len(dims))
    params = []
    for li, (fan_in, fan_out) in enumerate(dims):
        bound = 1.0 / jnp.sqrt(fan_in)
        w = jax.random.uniform(keys[2 * li], (fan_in, fan_out),
                               jnp.float32, -bound, bound)
        b = jax.random.uniform(keys[2 * li + 1], (fan_out,),
                               jnp.float32, -bound, bound)
        params.extend([w, b])
        if li < 3:  # first three Linear layers are followed by BatchNorm1d
            params.extend([
                jnp.ones((fan_out,), jnp.float32),    # gamma
                jnp.zeros((fan_out,), jnp.float32),   # beta
                jnp.zeros((fan_out,), jnp.float32),   # running_mean
                jnp.ones((fan_out,), jnp.float32),    # running_var
            ])
    return tuple(params)


def mlp_reference(x, params, eps=1e-5):
    """Pure-JAX f32 eval-mode reference for correctness check."""
    (w1, b1, g1, be1, rm1, rv1,
     w2, b2, g2, be2, rm2, rv2,
     w3, b3, g3, be3, rm3, rv3,
     w4, b4) = params

    def block(h, w, b, g, be, rm, rv):
        z = h @ w + b
        z = (z - rm) / jnp.sqrt(rv + eps) * g + be
        return jnp.maximum(z, 0.0)

    h = block(x, w1, b1, g1, be1, rm1, rv1)
    h = block(h, w2, b2, g2, be2, rm2, rv2)
    h = block(h, w3, b3, g3, be3, rm3, rv3)
    return h @ w4 + b4


if __name__ == "__main__":
    key = jax.random.PRNGKey(0)
    k_x, k_p = jax.random.split(key)

    batch, input_size = 16, 32
    x = jax.random.normal(k_x, (batch, input_size), jnp.float32)
    params = init_params(k_p, input_size)

    out = mlp_forward(x, params)
    out = jax.block_until_ready(out)

    ref = mlp_reference(x, params)
    assert out.shape == (batch, 2), out.shape
    # bf16 matmul inputs (f32 accumulation): relaxed tolerance vs f32 reference.
    assert jnp.allclose(out, ref, atol=5e-2, rtol=5e-2), (
        f"max abs err = {jnp.max(jnp.abs(out - ref))}")

    print("KERNEL_OK")
</pallas_src>

<mosaic_0001>
module attributes {stable_mosaic.version = 11 : i64} {
  func.func @mlp_kernel(%arg0: i32, %arg1: memref<16x32xf32, #tpu.memory_space<vmem>>, %arg2: memref<32x128xbf16, #tpu.memory_space<vmem>>, %arg3: memref<1x128xf32, #tpu.memory_space<vmem>>, %arg4: memref<128x128xbf16, #tpu.memory_space<vmem>>, %arg5: memref<1x128xf32, #tpu.memory_space<vmem>>, %arg6: memref<128x128xbf16, #tpu.memory_space<vmem>>, %arg7: memref<1x128xf32, #tpu.memory_space<vmem>>, %arg8: memref<128x128xbf16, #tpu.memory_space<vmem>>, %arg9: memref<1x2xf32, #tpu.memory_space<vmem>>, %arg10: memref<16x2xf32, #tpu.memory_space<vmem>>) attributes {dimension_semantics = [#tpu.dimension_semantics<parallel>], iteration_bounds = array<i64: 1>, scalar_prefetch = 0 : i64, scratch_operands = 0 : i64, tpu.core_type = #tpu.core_type<tc>, window_params = [{transform_indices = @transform_0, window_bounds = array<i64: 16, 32>}, {pipeline_mode = #tpu.pipeline_mode<synchronous>, transform_indices = @transform_1, window_bounds = array<i64: 32, 128>}, {pipeline_mode = #tpu.pipeline_mode<synchronous>, transform_indices = @transform_2, window_bounds = array<i64: 1, 128>}, {pipeline_mode = #tpu.pipeline_mode<synchronous>, transform_indices = @transform_3, window_bounds = array<i64: 128, 128>}, {pipeline_mode = #tpu.pipeline_mode<synchronous>, transform_indices = @transform_4, window_bounds = array<i64: 1, 128>}, {pipeline_mode = #tpu.pipeline_mode<synchronous>, transform_indices = @transform_5, window_bounds = array<i64: 128, 128>}, {pipeline_mode = #tpu.pipeline_mode<synchronous>, transform_indices = @transform_6, window_bounds = array<i64: 1, 128>}, {pipeline_mode = #tpu.pipeline_mode<synchronous>, transform_indices = @transform_7, window_bounds = array<i64: 128, 128>}, {pipeline_mode = #tpu.pipeline_mode<synchronous>, transform_indices = @transform_8, window_bounds = array<i64: 1, 2>}, {transform_indices = @transform_9, window_bounds = array<i64: 16, 2>}]} {
    %c0 = arith.constant 0 : index
    %c0_0 = arith.constant 0 : index
    %0 = vector.load %arg1[%c0, %c0_0] : memref<16x32xf32, #tpu.memory_space<vmem>>, vector<16x32xf32>
    %1 = arith.truncf %0 : vector<16x32xf32> to vector<16x32xbf16>
    %c0_1 = arith.constant 0 : index
    %c0_2 = arith.constant 0 : index
    %2 = vector.load %arg2[%c0_1, %c0_2] : memref<32x128xbf16, #tpu.memory_space<vmem>>, vector<32x128xbf16>
    %cst = arith.constant dense<0.000000e+00> : vector<16x128xf32>
    %3 = tpu.matmul %1, %2, %cst {dimension_numbers = #tpu.dot_dimension_numbers<[1], [0], [0], [1], [0, 0, 1, 1], [], []>} : vector<16x32xbf16>, vector<32x128xbf16>, vector<16x128xf32> -> vector<16x128xf32>
    %c0_3 = arith.constant 0 : index
    %c0_4 = arith.constant 0 : index
    %4 = vector.load %arg3[%c0_3, %c0_4] : memref<1x128xf32, #tpu.memory_space<vmem>>, vector<1x128xf32>
    %5 = vector.broadcast %4 : vector<1x128xf32> to vector<16x128xf32>
    %6 = arith.addf %3, %5 : vector<16x128xf32>
    %cst_5 = arith.constant 0.000000e+00 : f32
    %7 = vector.broadcast %cst_5 : f32 to vector<16x128xf32>
    %8 = arith.maximumf %6, %7 : vector<16x128xf32>
    %9 = arith.truncf %8 : vector<16x128xf32> to vector<16x128xbf16>
    %c0_6 = arith.constant 0 : index
    %c0_7 = arith.constant 0 : index
    %10 = vector.load %arg4[%c0_6, %c0_7] : memref<128x128xbf16, #tpu.memory_space<vmem>>, vector<128x128xbf16>
    %cst_8 = arith.constant dense<0.000000e+00> : vector<16x128xf32>
    %11 = tpu.matmul %9, %10, %cst_8 {dimension_numbers = #tpu.dot_dimension_numbers<[1], [0], [0], [1], [0, 0, 1, 1], [], []>} : vector<16x128xbf16>, vector<128x128xbf16>, vector<16x128xf32> -> vector<16x128xf32>
    %c0_9 = arith.constant 0 : index
    %c0_10 = arith.constant 0 : index
    %12 = vector.load %arg5[%c0_9, %c0_10] : memref<1x128xf32, #tpu.memory_space<vmem>>, vector<1x128xf32>
    %13 = vector.broadcast %12 : vector<1x128xf32> to vector<16x128xf32>
    %14 = arith.addf %11, %13 : vector<16x128xf32>
    %cst_11 = arith.constant 0.000000e+00 : f32
    %15 = vector.broadcast %cst_11 : f32 to vector<16x128xf32>
    %16 = arith.maximumf %14, %15 : vector<16x128xf32>
    %17 = arith.truncf %16 : vector<16x128xf32> to vector<16x128xbf16>
    %c0_12 = arith.constant 0 : index
    %c0_13 = arith.constant 0 : index
    %18 = vector.load %arg6[%c0_12, %c0_13] : memref<128x128xbf16, #tpu.memory_space<vmem>>, vector<128x128xbf16>
    %cst_14 = arith.constant dense<0.000000e+00> : vector<16x128xf32>
    %19 = tpu.matmul %17, %18, %cst_14 {dimension_numbers = #tpu.dot_dimension_numbers<[1], [0], [0], [1], [0, 0, 1, 1], [], []>} : vector<16x128xbf16>, vector<128x128xbf16>, vector<16x128xf32> -> vector<16x128xf32>
    %c0_15 = arith.constant 0 : index
    %c0_16 = arith.constant 0 : index
    %20 = vector.load %arg7[%c0_15, %c0_16] : memref<1x128xf32, #tpu.memory_space<vmem>>, vector<1x128xf32>
    %21 = vector.broadcast %20 : vector<1x128xf32> to vector<16x128xf32>
    %22 = arith.addf %19, %21 : vector<16x128xf32>
    %cst_17 = arith.constant 0.000000e+00 : f32
    %23 = vector.broadcast %cst_17 : f32 to vector<16x128xf32>
    %24 = arith.maximumf %22, %23 : vector<16x128xf32>
    %25 = arith.truncf %24 : vector<16x128xf32> to vector<16x128xbf16>
    %c0_18 = arith.constant 0 : index
    %c0_19 = arith.constant 0 : index
    %26 = vector.load %arg8[%c0_18, %c0_19] : memref<128x128xbf16, #tpu.memory_space<vmem>>, vector<128x128xbf16>
    %cst_20 = arith.constant dense<0.000000e+00> : vector<16x128xf32>
    %27 = tpu.matmul %25, %26, %cst_20 {dimension_numbers = #tpu.dot_dimension_numbers<[1], [0], [0], [1], [0, 0, 1, 1], [], []>} : vector<16x128xbf16>, vector<128x128xbf16>, vector<16x128xf32> -> vector<16x128xf32>
    %28 = vector.extract_strided_slice %27 {offsets = [0, 0], sizes = [16, 2], strides = [1, 1]} : vector<16x128xf32> to vector<16x2xf32>
    %c0_21 = arith.constant 0 : index
    %c0_22 = arith.constant 0 : index
    %29 = vector.load %arg9[%c0_21, %c0_22] : memref<1x2xf32, #tpu.memory_space<vmem>>, vector<1x2xf32>
    %30 = vector.broadcast %29 : vector<1x2xf32> to vector<16x2xf32>
    %31 = arith.addf %28, %30 : vector<16x2xf32>
    %c0_23 = arith.constant 0 : index
    %c0_24 = arith.constant 0 : index
    %32 = vector.load %arg10[%c0_23, %c0_24] : memref<16x2xf32, #tpu.memory_space<vmem>>, vector<16x2xf32>
    tpu.vector_store %arg10[%c0_23, %c0_24], %31 {strides = array<i32>} : memref<16x2xf32, #tpu.memory_space<vmem>>, vector<16x2xf32>,
    return
  }
  func.func @transform_0(%arg0: i32) -> (i32, i32) {
    %c0_i32 = arith.constant 0 : i32
    %c0_i32_0 = arith.constant 0 : i32
    return %arg0, %c0_i32 : i32, i32
  }
  func.func @transform_1(%arg0: i32) -> (i32, i32) {
    %c0_i32 = arith.constant 0 : i32
    %c0_i32_0 = arith.constant 0 : i32
    %c0_i32_1 = arith.constant 0 : i32
    return %c0_i32, %c0_i32_0 : i32, i32
  }
  func.func @transform_2(%arg0: i32) -> (i32, i32) {
    %c0_i32 = arith.constant 0 : i32
    %c0_i32_0 = arith.constant 0 : i32
    %c0_i32_1 = arith.constant 0 : i32
    return %c0_i32, %c0_i32_0 : i32, i32
  }
  func.func @transform_3(%arg0: i32) -> (i32, i32) {
    %c0_i32 = arith.constant 0 : i32
    %c0_i32_0 = arith.constant 0 : i32
    %c0_i32_1 = arith.constant 0 : i32
    return %c0_i32, %c0_i32_0 : i32, i32
  }
  func.func @transform_4(%arg0: i32) -> (i32, i32) {
    %c0_i32 = arith.constant 0 : i32
    %c0_i32_0 = arith.constant 0 : i32
    %c0_i32_1 = arith.constant 0 : i32
    return %c0_i32, %c0_i32_0 : i32, i32
  }
  func.func @transform_5(%arg0: i32) -> (i32, i32) {
    %c0_i32 = arith.constant 0 : i32
    %c0_i32_0 = arith.constant 0 : i32
    %c0_i32_1 = arith.constant 0 : i32
    return %c0_i32, %c0_i32_0 : i32, i32
  }
  func.func @transform_6(%arg0: i32) -> (i32, i32) {
    %c0_i32 = arith.constant 0 : i32
    %c0_i32_0 = arith.constant 0 : i32
    %c0_i32_1 = arith.constant 0 : i32
    return %c0_i32, %c0_i32_0 : i32, i32
  }
  func.func @transform_7(%arg0: i32) -> (i32, i32) {
    %c0_i32 = arith.constant 0 : i32
    %c0_i32_0 = arith.constant 0 : i32
    %c0_i32_1 = arith.constant 0 : i32
    return %c0_i32, %c0_i32_0 : i32, i32
  }
  func.func @transform_8(%arg0: i32) -> (i32, i32) {
    %c0_i32 = arith.constant 0 : i32
    %c0_i32_0 = arith.constant 0 : i32
    %c0_i32_1 = arith.constant 0 : i32
    return %c0_i32, %c0_i32_0 : i32, i32
  }
  func.func @transform_9(%arg0: i32) -> (i32, i32) {
    %c0_i32 = arith.constant 0 : i32
    %c0_i32_0 = arith.constant 0 : i32
    return %arg0, %c0_i32 : i32, i32
  }
}

</mosaic_0001>

<llo_original>
// kernel: mlp_forward.1
$region0: #{mlp_forward.1}
  #allocation0 [shape = 'u32[]', space=smem, size = 0x4, offset = 0x4, fixed_abs, tag = 'smem constant byte address 0x4 - core index']
  #allocation1 [shape = 'u32[72,128]{1,0:T(1,128)}', space=vmem, size = 0x9000, scoped, tag = 'internal scratch']
  %s0 = inlined_call_operand.vmem [shape: f32[16,32], index: 0, kind: input, shape index: {}]
  %s1 = inlined_call_operand.vmem [shape: bf16[32,128], index: 1, kind: input, shape index: {}]
  %s2 = inlined_call_operand.vmem [shape: f32[1,128], index: 2, kind: input, shape index: {}]
  %s3 = inlined_call_operand.vmem [shape: bf16[128,128], index: 3, kind: input, shape index: {}]
  %s4 = inlined_call_operand.vmem [shape: f32[1,128], index: 4, kind: input, shape index: {}]
  %s5 = inlined_call_operand.vmem [shape: bf16[128,128], index: 5, kind: input, shape index: {}]
  %s6 = inlined_call_operand.vmem [shape: f32[1,128], index: 6, kind: input, shape index: {}]
  %s7 = inlined_call_operand.vmem [shape: bf16[128,128], index: 7, kind: input, shape index: {}]
  %s8 = inlined_call_operand.vmem [shape: f32[1,2], index: 8, kind: input, shape index: {}]
  %s9 = inlined_call_operand.vmem [shape: f32[16,2], index: 9, kind: output, shape index: {}]
  %s10 = sld [smem:[#allocation0]]
  $region46: #{mlp_forward.1} parent=0
    _
  %s12 = ssub.s32 1, %s10
  %s13 = scalar_select 0, %s12, %s10
  // Predicated region
  $region2: #{mlp_forward.1} parent=0 // pred_check
    _
  $region3: #{mlp_forward.1} parent=0 // pred_check_branch
    %15 = sbr.rel (0) target = $region5
  $region4: #{mlp_forward.1} parent=0 // pred_region
    _
  $region5: #{mlp_forward.1} parent=0 // pred_fallthru
    _
  // Predicated region
  $region6: #{mlp_forward.1} parent=0 // pred_check
    _
  $region7: #{mlp_forward.1} parent=0 // pred_check_branch
    %17 = sbr.rel (0) target = $region9
  $region8: #{mlp_forward.1} parent=0 // pred_region
    _
  $region9: #{mlp_forward.1} parent=0 // pred_fallthru
    _
  // Predicated region
  $region10: #{mlp_forward.1} parent=0 // pred_check
    _
  $region11: #{mlp_forward.1} parent=0 // pred_check_branch
    %19 = sbr.rel (0) target = $region13
  $region12: #{mlp_forward.1} parent=0 // pred_region
    _
  $region13: #{mlp_forward.1} parent=0 // pred_fallthru
    _
  // Predicated region
  $region14: #{mlp_forward.1} parent=0 // pred_check
    _
  $region15: #{mlp_forward.1} parent=0 // pred_check_branch
    %21 = sbr.rel (0) target = $region17
  $region16: #{mlp_forward.1} parent=0 // pred_region
    _
  $region17: #{mlp_forward.1} parent=0 // pred_fallthru
    _
  // Predicated region
  $region18: #{mlp_forward.1} parent=0 // pred_check
    _
  $region19: #{mlp_forward.1} parent=0 // pred_check_branch
    %23 = sbr.rel (0) target = $region21
  $region20: #{mlp_forward.1} parent=0 // pred_region
    _
  $region21: #{mlp_forward.1} parent=0 // pred_fallthru
    _
  // Predicated region
  $region22: #{mlp_forward.1} parent=0 // pred_check
    _
  $region23: #{mlp_forward.1} parent=0 // pred_check_branch
    %25 = sbr.rel (0) target = $region25
  $region24: #{mlp_forward.1} parent=0 // pred_region
    _
  $region25: #{mlp_forward.1} parent=0 // pred_fallthru
    _
  // Predicated region
  $region26: #{mlp_forward.1} parent=0 // pred_check
    _
  $region27: #{mlp_forward.1} parent=0 // pred_check_branch
    %27 = sbr.rel (0) target = $region29
  $region28: #{mlp_forward.1} parent=0 // pred_region
    _
  $region29: #{mlp_forward.1} parent=0 // pred_fallthru
    _
  // Predicated region
  $region30: #{mlp_forward.1} parent=0 // pred_check
    _
  $region31: #{mlp_forward.1} parent=0 // pred_check_branch
    %29 = sbr.rel (0) target = $region33
  $region32: #{mlp_forward.1} parent=0 // pred_region
    _
  $region33: #{mlp_forward.1} parent=0 // pred_fallthru
    _
  // Predicated region
  $region34: #{mlp_forward.1} parent=0 // pred_check
    _
  $region35: #{mlp_forward.1} parent=0 // pred_check_branch
    %31 = sbr.rel (0) target = $region37
  $region36: #{mlp_forward.1} parent=0 // pred_region
    _
  $region37: #{mlp_forward.1} parent=0 // pred_fallthru
    _
  %v33 = vld [vmem:[%s0] sm:$0xff]
  %v34 = vld [vmem:[%s0 + $0x8] sm:$0xff]
  %v35 = vpack.c.bf16 %v34, %v33
  %v36 = vld [vmem:[%s1] sm:$0xf]
  %v37 = vld [vmem:[%s1 + $0x4] sm:$0xf]
  %v38 = vld [vmem:[%s1 + $0x8] sm:$0xf]
  %v39 = vld [vmem:[%s1 + $0xc] sm:$0xf]
  %v40 = vld [vmem:[%s2] sm:$0x1]
  %v42 = vperm.slane %v40, 0
  %v48 = vunpack.c.l.b16 %v36
  %v49 = vunpack.c.l.b16 %v37
  %v50 = vunpack.c.l.b16 %v38
  %v51 = vunpack.c.l.b16 %v39
  %v52 = vpack.c.b16 %v49, %v48
  %v53 = vpack.c.b16 %v51, %v50
  %vm56 = vcmask 261120
  %v58 = vsel %vm56, %v35, 0
  %60 = vmatpush.bf16.msra.mxu0 0
  %61 = vmatpush.bf16.msra.mxu0 0
  %62 = vmatpush.bf16.msra.mxu0 0
  %63 = vmatpush.bf16.msra.mxu0 0
  %64 = vmatpush.bf16.msra.mxu0 0
  %65 = vmatpush.bf16.msra.mxu0 0
  %66 = vmatpush.bf16.msra.mxu0 %v53
  %67 = vmatpush.bf16.msra.mxu0 %v52
  %68 = vmatmul.bf16.gmra.mxu0 %v58
  %v69 = vpop.f32.mrf.mxu0
  %v70 = vadd.f32 %v42, %v69
  %v71 = vpop.f32.mrf.mxu0
  %v72 = vadd.f32 %v42, %v71
  %73 = vdwg.mxu0
  %v74 = vmax.f32 %v70, 0.0
  %v75 = vmax.f32 %v72, 0.0
  %v76 = vpack.c.bf16 %v75, %v74
  %v77 = vld [vmem:[%s3] sm:$0xf]
  %v78 = vld [vmem:[%s3 + $0x4] sm:$0xf]
  %v79 = vld [vmem:[%s3 + $0x8] sm:$0xf]
  %v80 = vld [vmem:[%s3 + $0xc] sm:$0xf]
  %v81 = vld [vmem:[%s3 + $0x10] sm:$0xf]
  %v82 = vld [vmem:[%s3 + $0x14] sm:$0xf]
  %v83 = vld [vmem:[%s3 + $0x18] sm:$0xf]
  %v84 = vld [vmem:[%s3 + $0x1c] sm:$0xf]
  %v85 = vld [vmem:[%s3 + $0x20] sm:$0xf]
  %v86 = vld [vmem:[%s3 + $0x24] sm:$0xf]
  %v87 = vld [vmem:[%s3 + $0x28] sm:$0xf]
  %v88 = vld [vmem:[%s3 + $0x2c] sm:$0xf]
  %v89 = vld [vmem:[%s3 + $0x30] sm:$0xf]
  %v90 = vld [vmem:[%s3 + $0x34] sm:$0xf]
  %v91 = vld [vmem:[%s3 + $0x38] sm:$0xf]
  %v92 = vld [vmem:[%s3 + $0x3c] sm:$0xf]
  %v93 = vld [vmem:[%s4] sm:$0x1]
  %v95 = vperm.slane %v93, 0
  %v113 = vunpack.c.l.b16 %v77
  %v114 = vunpack.c.l.b16 %v78
  %v115 = vunpack.c.l.b16 %v79
  %v116 = vunpack.c.l.b16 %v80
  %v117 = vunpack.c.l.b16 %v81
  %v118 = vunpack.c.l.b16 %v82
  %v119 = vunpack.c.l.b16 %v83
  %v120 = vunpack.c.l.b16 %v84
  %v121 = vunpack.c.l.b16 %v85
  %v122 = vunpack.c.l.b16 %v86
  %v123 = vunpack.c.l.b16 %v87
  %v124 = vunpack.c.l.b16 %v88
  %v125 = vunpack.c.l.b16 %v89
  %v126 = vunpack.c.l.b16 %v90
  %v127 = vunpack.c.l.b16 %v91
  %v128 = vunpack.c.l.b16 %v92
  %v129 = vpack.c.b16 %v114, %v113
  %v130 = vpack.c.b16 %v116, %v115
  %v131 = vpack.c.b16 %v118, %v117
  %v132 = vpack.c.b16 %v120, %v119
  %v133 = vpack.c.b16 %v122, %v121
  %v134 = vpack.c.b16 %v124, %v123
  %v135 = vpack.c.b16 %v126, %v125
  %v136 = vpack.c.b16 %v128, %v127
  %145 = vmatpush.bf16.msra.mxu0 %v136
  %146 = vmatpush.bf16.msra.mxu0 %v135
  %147 = vmatpush.bf16.msra.mxu0 %v134
  %148 = vmatpush.bf16.msra.mxu0 %v133
  %149 = vmatpush.bf16.msra.mxu0 %v132
  %150 = vmatpush.bf16.msra.mxu0 %v131
  %151 = vmatpush.bf16.msra.mxu0 %v130
  %152 = vmatpush.bf16.msra.mxu0 %v129
  %153 = vmatmul.bf16.gmra.mxu0 %v76
  %v154 = vpop.f32.mrf.mxu0
  %v155 = vadd.f32 %v95, %v154
  %v156 = vpop.f32.mrf.mxu0
  %v157 = vadd.f32 %v95, %v156
  %158 = vdwg.mxu0
  %v159 = vmax.f32 %v155, 0.0
  %v160 = vmax.f32 %v157, 0.0
  %v161 = vpack.c.bf16 %v160, %v159
  %v162 = vld [vmem:[%s5] sm:$0xf]
  %v163 = vld [vmem:[%s5 + $0x4] sm:$0xf]
  %v164 = vld [vmem:[%s5 + $0x8] sm:$0xf]
  %v165 = vld [vmem:[%s5 + $0xc] sm:$0xf]
  %v166 = vld [vmem:[%s5 + $0x10] sm:$0xf]
  %v167 = vld [vmem:[%s5 + $0x14] sm:$0xf]
  %v168 = vld [vmem:[%s5 + $0x18] sm:$0xf]
  %v169 = vld [vmem:[%s5 + $0x1c] sm:$0xf]
  %v170 = vld [vmem:[%s5 + $0x20] sm:$0xf]
  %v171 = vld [vmem:[%s5 + $0x24] sm:$0xf]
  %v172 = vld [vmem:[%s5 + $0x28] sm:$0xf]
  %v173 = vld [vmem:[%s5 + $0x2c] sm:$0xf]
  %v174 = vld [vmem:[%s5 + $0x30] sm:$0xf]
  %v175 = vld [vmem:[%s5 + $0x34] sm:$0xf]
  %v176 = vld [vmem:[%s5 + $0x38] sm:$0xf]
  %v177 = vld [vmem:[%s5 + $0x3c] sm:$0xf]
  %v178 = vld [vmem:[%s6] sm:$0x1]
  %v180 = vperm.slane %v178, 0
  %v198 = vunpack.c.l.b16 %v162
  %v199 = vunpack.c.l.b16 %v163
  %v200 = vunpack.c.l.b16 %v164
  %v201 = vunpack.c.l.b16 %v165
  %v202 = vunpack.c.l.b16 %v166
  %v203 = vunpack.c.l.b16 %v167
  %v204 = vunpack.c.l.b16 %v168
  %v205 = vunpack.c.l.b16 %v169
  %v206 = vunpack.c.l.b16 %v170
  %v207 = vunpack.c.l.b16 %v171
  %v208 = vunpack.c.l.b16 %v172
  %v209 = vunpack.c.l.b16 %v173
  %v210 = vunpack.c.l.b16 %v174
  %v211 = vunpack.c.l.b16 %v175
  %v212 = vunpack.c.l.b16 %v176
  %v213 = vunpack.c.l.b16 %v177
  %v214 = vpack.c.b16 %v199, %v198
  %v215 = vpack.c.b16 %v201, %v200
  %v216 = vpack.c.b16 %v203, %v202
  %v217 = vpack.c.b16 %v205, %v204
  %v218 = vpack.c.b16 %v207, %v206
  %v219 = vpack.c.b16 %v209, %v208
  %v220 = vpack.c.b16 %v211, %v210
  %v221 = vpack.c.b16 %v213, %v212
  %230 = vmatpush.bf16.msra.mxu0 %v221
  %231 = vmatpush.bf16.msra.mxu0 %v220
  %232 = vmatpush.bf16.msra.mxu0 %v219
  %233 = vmatpush.bf16.msra.mxu0 %v218
  %234 = vmatpush.bf16.msra.mxu0 %v217
  %235 = vmatpush.bf16.msra.mxu0 %v216
  %236 = vmatpush.bf16.msra.mxu0 %v215
  %237 = vmatpush.bf16.msra.mxu0 %v214
  %238 = vmatmul.bf16.gmra.mxu0 %v161
  %v239 = vpop.f32.mrf.mxu0
  %v240 = vadd.f32 %v180, %v239
  %v241 = vpop.f32.mrf.mxu0
  %v242 = vadd.f32 %v180, %v241
  %243 = vdwg.mxu0
  %v244 = vmax.f32 %v240, 0.0
  %v245 = vmax.f32 %v242, 0.0
  %v246 = vpack.c.bf16 %v245, %v244
  %v247 = vld [vmem:[%s7] sm:$0xf]
  %v248 = vld [vmem:[%s7 + $0x4] sm:$0xf]
  %v249 = vld [vmem:[%s7 + $0x8] sm:$0xf]
  %v250 = vld [vmem:[%s7 + $0xc] sm:$0xf]
  %v251 = vld [vmem:[%s7 + $0x10] sm:$0xf]
  %v252 = vld [vmem:[%s7 + $0x14] sm:$0xf]
  %v253 = vld [vmem:[%s7 + $0x18] sm:$0xf]
  %v254 = vld [vmem:[%s7 + $0x1c] sm:$0xf]
  %v255 = vld [vmem:[%s7 + $0x20] sm:$0xf]
  %v256 = vld [vmem:[%s7 + $0x24] sm:$0xf]
  %v257 = vld [vmem:[%s7 + $0x28] sm:$0xf]
  %v258 = vld [vmem:[%s7 + $0x2c] sm:$0xf]
  %v259 = vld [vmem:[%s7 + $0x30] sm:$0xf]
  %v260 = vld [vmem:[%s7 + $0x34] sm:$0xf]
  %v261 = vld [vmem:[%s7 + $0x38] sm:$0xf]
  %v262 = vld [vmem:[%s7 + $0x3c] sm:$0xf]
  %v279 = vunpack.c.l.b16 %v247
  %v280 = vunpack.c.l.b16 %v248
  %v281 = vunpack.c.l.b16 %v249
  %v282 = vunpack.c.l.b16 %v250
  %v283 = vunpack.c.l.b16 %v251
  %v284 = vunpack.c.l.b16 %v252
  %v285 = vunpack.c.l.b16 %v253
  %v286 = vunpack.c.l.b16 %v254
  %v287 = vunpack.c.l.b16 %v255
  %v288 = vunpack.c.l.b16 %v256
  %v289 = vunpack.c.l.b16 %v257
  %v290 = vunpack.c.l.b16 %v258
  %v291 = vunpack.c.l.b16 %v259
  %v292 = vunpack.c.l.b16 %v260
  %v293 = vunpack.c.l.b16 %v261
  %v294 = vunpack.c.l.b16 %v262
  %v295 = vpack.c.b16 %v280, %v279
  %v296 = vpack.c.b16 %v282, %v281
  %v297 = vpack.c.b16 %v284, %v283
  %v298 = vpack.c.b16 %v286, %v285
  %v299 = vpack.c.b16 %v288, %v287
  %v300 = vpack.c.b16 %v290, %v289
  %v301 = vpack.c.b16 %v292, %v291
  %v302 = vpack.c.b16 %v294, %v293
  %311 = vmatpush.bf16.msra.mxu0 %v302
  %312 = vmatpush.bf16.msra.mxu0 %v301
  %313 = vmatpush.bf16.msra.mxu0 %v300
  %314 = vmatpush.bf16.msra.mxu0 %v299
  %315 = vmatpush.bf16.msra.mxu0 %v298
  %316 = vmatpush.bf16.msra.mxu0 %v297
  %317 = vmatpush.bf16.msra.mxu0 %v296
  %318 = vmatpush.bf16.msra.mxu0 %v295
  %319 = vmatmul.bf16.gmra.mxu0 %v246
  %v320 = vpop.f32.mrf.mxu0
  %v321 = vadd.f32 0.0, %v320
  %v322 = vpop.f32.mrf.mxu0
  %v323 = vadd.f32 0.0, %v322
  %324 = vdwg.mxu0
  %v325 = vld [vmem:[%s8] sm:$0x1]
  %v327 = vperm.slane %v325, 0
  %v329 = vadd.f32 %v321, %v327
  %v330 = vadd.f32 %v323, %v327
  %vm331 = vcmask 15360
  %332 = vst.msk [vmem:[%s9] sm:$0xff] %vm331, %v329
  %333 = vst.msk [vmem:[%s9 + $0x8] sm:$0xff] %vm331, %v330
  // Predicated region
  $region38: #{mlp_forward.1} parent=0 // pred_check
    _
  $region39: #{mlp_forward.1} parent=0 // pred_check_branch
    %335 = sbr.rel (0) target = $region41
  $region40: #{mlp_forward.1} parent=0 // pred_region
    _
  $region41: #{mlp_forward.1} parent=0 // pred_fallthru
    _
  // Predicated region
  $region42: #{mlp_forward.1} parent=0 // pred_check
    _
  $region43: #{mlp_forward.1} parent=0 // pred_check_branch
    %337 = sbr.rel (0) target = $region45
  $region44: #{mlp_forward.1} parent=0 // pred_region
    _
  $region45: #{mlp_forward.1} parent=0 // pred_fallthru
    _

</llo_original>
